<compile_context>
chip_gen: v6e
topology: v6e:2x2x1
jax: 0.10.0
libtpu: 0.0.40
codegen_flags: <defaults>
</compile_context>

<pallas_src>
import functools

import jax
import jax.numpy as jnp
from jax.experimental import pallas as pl
from jax.experimental.pallas import tpu as pltpu

_LANES = 128
_SUB_ROWS = 512            # inner compute chunk: 64 f32 vregs per stream
_TARGET_BLOCK_ROWS = 8192  # cap on the DMA window (rows of 128 lanes)


def _round_up(x, m):
    return ((x + m - 1) // m) * m


def _pick_block_rows(rows, itemsizes):
    """Largest DMA window (in 128-lane rows) whose double-buffered input
    footprint stays under ~40% of this generation's physical VMEM."""
    try:
        vmem_cap = int(pltpu.get_tpu_info().vmem_capacity_bytes)
    except Exception:                      # info query unavailable -> assume v7x
        vmem_cap = 64 << 20
    vmem_cap = max(vmem_cap, 32 << 20)
    budget = (vmem_cap * 2) // 5           # double-buffered inputs <= 40% VMEM
    per_row = 2 * _LANES * sum(itemsizes)  # 2 pipeline buffers per input stream
    cap = (budget // per_row) // _SUB_ROWS * _SUB_ROWS
    cap = max(_SUB_ROWS, min(_TARGET_BLOCK_ROWS, cap))
    return min(cap, _round_up(rows, 8))


def _resolve_block_rows(rows, itemsizes, override):
    if override is not None:               # test hook; must be a multiple of 8
        return min(_round_up(override, 8), _round_up(rows, 8))
    return _pick_block_rows(rows, itemsizes)


def _vmem_limit_bytes(block_rows, itemsizes):
    window = block_rows * _LANES * sum(itemsizes)
    # 2x for double buffering + margin for chunk intermediates / outputs /
    # scratch; capped well under v7x's 64 MiB physical VMEM per TensorCore.
    return int(min(2 * window + (16 << 20), 48 << 20))


def _as_bool_mask(mval):
    """mask > 0, robust to bool / integer / floating mask dtypes."""
    if mval.dtype == jnp.bool_:
        return mval
    if jnp.issubdtype(mval.dtype, jnp.floating):
        return mval.astype(jnp.float32) > 0
    return mval.astype(jnp.int32) > 0


def _fold_to_vreg(x, groups):
    # (groups*8, 128) -> (8, 128): vreg-wise adds on the VPU; the single
    # cross-lane/sublane reduction happens once, in the JAX wrapper.
    return x.reshape(groups, 8, _LANES).sum(axis=0)


def _block_masked_l1_partials(pred_ref, gt_ref, mask_ref, blk, *,
                              block_rows, rows, gate_rows):
    """(sum |pred-gt| over mask>0, count of mask>0) for one (block_rows, 128)
    VMEM window, folded to lane-dense (8, 128) partials.

    Compute runs in _SUB_ROWS chunks so intermediates stay ~64 vregs even when
    the DMA window is 8192 rows. gate_rows additionally drops rows whose
    global row id is >= rows (partial trailing block or clamped duplicate
    blocks produced by the 2-way half split)."""
    sub = min(_SUB_ROWS, block_rows)
    n_full = block_rows // sub
    rem = block_rows - n_full * sub

    def chunk(lo, size):
        pv = pred_ref[pl.ds(lo, size), :].astype(jnp.float32)
        gv = gt_ref[pl.ds(lo, size), :].astype(jnp.float32)
        sel = _as_bool_mask(mask_ref[pl.ds(lo, size), :])
        if gate_rows:
            row_ids = (blk * block_rows + lo
                       + jax.lax.broadcasted_iota(jnp.int32, (size, _LANES), 0))
            sel = jnp.logical_and(sel, row_ids < rows)
        diff = jnp.abs(pv - gv)
        groups = size // 8
        s = _fold_to_vreg(jnp.where(sel, diff, jnp.float32(0.0)), groups)
        c = _fold_to_vreg(sel.astype(jnp.float32), groups)
        return s, c

    if n_full == 1 and rem == 0:
        return chunk(0, block_rows)

    zero = jnp.zeros((8, _LANES), jnp.float32)

    def body(i, carry):
        s, c = carry
        ds_, dc_ = chunk(pl.multiple_of(i * sub, sub), sub)
        return s + ds_, c + dc_

    s, c = jax.lax.fori_loop(0, n_full, body, (zero, zero))
    if rem:
        ds_, dc_ = chunk(n_full * sub, rem)
        s, c = s + ds_, c + dc_
    return s, c


# ----------------------------------------------------------------------------
# Plain ROI loss kernel (clas=None branch)
# ----------------------------------------------------------------------------
def _roi_l1_kernel(pred_ref, gt_ref, mask_ref, sum_out, cnt_out,
                   sum_acc, cnt_acc, *, rows, block_rows, bph, n_blocks,
                   halves):
    h = pl.program_id(0)   # 2-way half split ("parallel") -> one per TC on v7x
    r = pl.program_id(1)   # reduction within the half ("arbitrary")

    @pl.when(r == 0)
    def _():
        sum_acc[...] = jnp.zeros_like(sum_acc)
        cnt_acc[...] = jnp.zeros_like(cnt_acc)

    blk = h * bph + r
    # Only the (possibly partial) last real block and clamped duplicate blocks
    # from the half split need per-row gating; interior blocks take the
    # iota-free fast path so the kernel stays HBM-bound, not VALU-bound.
    edge_start = n_blocks - 1 if (rows % block_rows) else n_blocks
    has_edge = halves * bph > edge_start

    def accumulate(gate_rows):
        s, c = _block_masked_l1_partials(
            pred_ref, gt_ref, mask_ref, blk,
            block_rows=block_rows, rows=rows, gate_rows=gate_rows)
        sum_acc[...] += s
        cnt_acc[...] += c

    if not has_edge:
        accumulate(False)
    elif edge_start == 0:          # every block is an edge block
        accumulate(True)
    else:
        is_edge = blk >= edge_start

        @pl.when(jnp.logical_not(is_edge))
        def _():
            accumulate(False)

        @pl.when(is_edge)
        def _():
            accumulate(True)

    @pl.when(r == bph - 1)
    def _():
        sum_out[0] = sum_acc[...]
        cnt_out[0] = cnt_acc[...]


def _masked_l1_sum_count(pred_dose, gt_dose, mask, *, block_rows=None):
    """Returns (sum |pred-gt| over mask>0, count of mask>0) as f32 scalars."""
    pred_f = pred_dose.reshape(-1)
    gt_f = gt_dose.reshape(-1)
    mask_f = mask.reshape(-1)
    n = pred_f.shape[0]
    if n == 0:
        return jnp.float32(0.0), jnp.float32(0.0)

    # Pad only to the next lane multiple (<128 elements) when needed; padded
    # mask elements are zero -> contribute nothing.
    pad = (-n) % _LANES
    if pad:
        pred_f = jnp.pad(pred_f, (0, pad))
        gt_f = jnp.pad(gt_f, (0, pad))
        mask_f = jnp.pad(mask_f, (0, pad))
    rows = (n + pad) // _LANES

    pred2 = pred_f.reshape(rows, _LANES)
    gt2 = gt_f.reshape(rows, _LANES)
    mask2 = mask_f.reshape(rows, _LANES)

    itemsizes = [x.dtype.itemsize for x in (pred2, gt2, mask2)]
    block_rows = _resolve_block_rows(rows, itemsizes, block_rows)
    n_blocks = pl.cdiv(rows, block_rows)
    halves = 2 if n_blocks >= 2 else 1      # dual-TC split only when useful
    bph = pl.cdiv(n_blocks, halves)         # blocks per half

    def in_map(h, r):
        # Clamp so no DMA ever starts past the last real block; duplicated /
        # partial blocks are gated in-kernel.
        return (jnp.minimum(h * bph + r, n_blocks - 1), 0)

    blk_spec = pl.BlockSpec((block_rows, _LANES), in_map)
    out_spec = pl.BlockSpec((1, 8, _LANES), lambda h, r: (h, 0, 0))

    kernel = functools.partial(_roi_l1_kernel, rows=rows,
                               block_rows=block_rows, bph=bph,
                               n_blocks=n_blocks, halves=halves)

    sum_out, cnt_out = pl.pallas_call(
        kernel,
        out_shape=(jax.ShapeDtypeStruct((halves, 8, _LANES), jnp.float32),
                   jax.ShapeDtypeStruct((halves, 8, _LANES), jnp.float32)),
        grid_spec=pltpu.PrefetchScalarGridSpec(
            num_scalar_prefetch=0,
            grid=(halves, bph),
            in_specs=[blk_spec, blk_spec, blk_spec],
            out_specs=[out_spec, out_spec],
            scratch_shapes=[pltpu.VMEM((8, _LANES), jnp.float32),
                            pltpu.VMEM((8, _LANES), jnp.float32)],
        ),
        compiler_params=pltpu.CompilerParams(
            dimension_semantics=("parallel", "arbitrary"),
            vmem_limit_bytes=_vmem_limit_bytes(block_rows, itemsizes)),
    )(pred2, gt2, mask2)

    # Tiny final reduction of lane-dense partials in plain JAX.
    return jnp.sum(sum_out), jnp.sum(cnt_out)


def _masked_l1_mean(pred_dose, gt_dose, mask, *, block_rows=None):
    s, c = _masked_l1_sum_count(pred_dose, gt_dose, mask, block_rows=block_rows)
    # Empty ROI -> reference falls back to L1(zeros(2), zeros(2)) == 0.0
    return jnp.where(c > 0.0, s / jnp.maximum(c, 1.0), jnp.float32(0.0))


def loss_roi(pred, gt, *, block_rows=None):
    """Equivalent of Loss_ROI.forward(pred, gt) with clas=None, weights=None."""
    return _masked_l1_mean(pred[0], gt[0], gt[1], block_rows=block_rows)


# ----------------------------------------------------------------------------
# Fused classwise ROI loss kernel (clas / weights branch, 2 classes)
# ----------------------------------------------------------------------------
def _roi_l1_classwise_kernel(clas_ref, pred_ref, gt_ref, mask_ref,
                             sum_out, cnt_out, sum_acc, cnt_acc,
                             *, rows, block_rows, bph, n_blocks, halves,
                             batch):
    h = pl.program_id(0)   # half split ("parallel")
    b = pl.program_id(1)   # batch element
    r = pl.program_id(2)   # blocks within the half

    @pl.when(jnp.logical_and(b == 0, r == 0))
    def _():
        sum_acc[...] = jnp.zeros_like(sum_acc)
        cnt_acc[...] = jnp.zeros_like(cnt_acc)

    blk = h * bph + r
    edge_start = n_blocks - 1 if (rows % block_rows) else n_blocks
    has_edge = halves * bph > edge_start

    cls = clas_ref[b]                                   # SMEM scalar read
    w0 = jnp.where(cls == 0, jnp.float32(1.0), jnp.float32(0.0))
    w1 = jnp.where(cls == 1, jnp.float32(1.0), jnp.float32(0.0))

    def accumulate(gate_rows):
        s, c = _block_masked_l1_partials(
            pred_ref, gt_ref, mask_ref, blk,
            block_rows=block_rows, rows=rows, gate_rows=gate_rows)
        sum_acc[0] = sum_acc[0] + w0 * s
        cnt_acc[0] = cnt_acc[0] + w0 * c
        sum_acc[1] = sum_acc[1] + w1 * s
        cnt_acc[1] = cnt_acc[1] + w1 * c

    if not has_edge:
        accumulate(False)
    elif edge_start == 0:
        accumulate(True)
    else:
        is_edge = blk >= edge_start

        @pl.when(jnp.logical_not(is_edge))
        def _():
            accumulate(False)

        @pl.when(is_edge)
        def _():
            accumulate(True)

    @pl.when(jnp.logical_and(b == batch - 1, r == bph - 1))
    def _():
        sum_out[0] = sum_acc[...]
        cnt_out[0] = cnt_acc[...]


def _classwise_sums_counts(pred_dose, gt_dose, mask, clas, *, block_rows=None):
    batch = pred_dose.shape[0]
    pred2 = pred_dose.reshape(batch, -1)
    gt2 = gt_dose.reshape(batch, -1)
    mask2 = mask.reshape(batch, -1)
    n = pred2.shape[1]
    pad = (-n) % _LANES
    if pad:
        pred2 = jnp.pad(pred2, ((0, 0), (0, pad)))
        gt2 = jnp.pad(gt2, ((0, 0), (0, pad)))
        mask2 = jnp.pad(mask2, ((0, 0), (0, pad)))
    rows = (n + pad) // _LANES
    pred3 = pred2.reshape(batch, rows, _LANES)
    gt3 = gt2.reshape(batch, rows, _LANES)
    mask3 = mask2.reshape(batch, rows, _LANES)

    itemsizes = [x.dtype.itemsize for x in (pred3, gt3, mask3)]
    block_rows = _resolve_block_rows(rows, itemsizes, block_rows)
    n_blocks = pl.cdiv(rows, block_rows)
    halves = 2 if n_blocks >= 2 else 1
    bph = pl.cdiv(n_blocks, halves)

    def in_map(h, b, r, clas_ref):
        return (b, jnp.minimum(h * bph + r, n_blocks - 1), 0)

    blk_spec = pl.BlockSpec((None, block_rows, _LANES), in_map)
    out_spec = pl.BlockSpec((1, 2, 8, _LANES),
                            lambda h, b, r, clas_ref: (h, 0, 0, 0))

    kernel = functools.partial(_roi_l1_classwise_kernel, rows=rows,
                               block_rows=block_rows, bph=bph,
                               n_blocks=n_blocks, halves=halves, batch=batch)

    sum_out, cnt_out = pl.pallas_call(
        kernel,
        out_shape=(jax.ShapeDtypeStruct((halves, 2, 8, _LANES), jnp.float32),
                   jax.ShapeDtypeStruct((halves, 2, 8, _LANES), jnp.float32)),
        grid_spec=pltpu.PrefetchScalarGridSpec(
            num_scalar_prefetch=1,
            grid=(halves, batch, bph),
            in_specs=[blk_spec, blk_spec, blk_spec],
            out_specs=[out_spec, out_spec],
            scratch_shapes=[pltpu.VMEM((2, 8, _LANES), jnp.float32),
                            pltpu.VMEM((2, 8, _LANES), jnp.float32)],
        ),
        compiler_params=pltpu.CompilerParams(
            dimension_semantics=("parallel", "arbitrary", "arbitrary"),
            vmem_limit_bytes=_vmem_limit_bytes(block_rows, itemsizes)),
    )(jnp.asarray(clas).astype(jnp.int32), pred3, gt3, mask3)

    return (jnp.sum(sum_out, axis=(0, 2, 3)),
            jnp.sum(cnt_out, axis=(0, 2, 3)))


def loss_roi_classwise(pred, gt, clas, weights, *, block_rows=None):
    """Clas/weights branch (2 classes). Matches the PyTorch boolean-indexing
    semantics: each class's batch elements are pooled and a single masked mean
    is taken over the pooled voxels, then weight-summed."""
    # TODO(synk): assumes exactly 2 classes with a per-batch-element `clas`
    # vector, as in the reference module; per-voxel labels are not handled.
    sums, cnts = _classwise_sums_counts(pred[0], gt[0], gt[1], clas,
                                        block_rows=block_rows)
    total = jnp.float32(0.0)
    for i in range(2):
        mean_i = jnp.where(cnts[i] > 0.0,
                           sums[i] / jnp.maximum(cnts[i], 1.0),
                           jnp.float32(0.0))
        total = total + weights[i] * mean_i
    return total


# ----------------------------------------------------------------------------
# Self-test
# ----------------------------------------------------------------------------
def _ref_masked_mean(p, g, m):
    mb = m > 0
    cnt = mb.sum()
    return jnp.where(cnt > 0,
                     jnp.sum(jnp.abs(p - g) * mb) / jnp.maximum(cnt, 1),
                     0.0)


def _ref_classwise(p, g, m, clas, weights):
    total = 0.0
    for i in range(2):
        sel = (clas == i).astype(m.dtype)[:, None, None, None]
        total = total + weights[i] * _ref_masked_mean(p, g, m * sel)
    return total


if __name__ == "__main__":
    keys = jax.random.split(jax.random.PRNGKey(0), 10)

    # --- primary small case (NCHW dose volumes, like the module) -------------
    B, C, H, W = 2, 4, 16, 16
    pred_dose = jax.random.normal(keys[0], (B, C, H, W), dtype=jnp.float32)
    gt_dose = jax.random.normal(keys[1], (B, C, H, W), dtype=jnp.float32)
    mask = (jax.random.uniform(keys[2], (B, C, H, W)) > 0.5).astype(jnp.float32)
    pred, gt = (pred_dose,), (gt_dose, mask)

    loss = jax.block_until_ready(loss_roi(pred, gt))
    ref = _ref_masked_mean(pred_dose, gt_dose, mask)
    assert jnp.allclose(loss, ref, rtol=1e-5, atol=1e-6), (loss, ref)

    # --- empty-ROI fallback (== L1(zeros(2), zeros(2)) == 0) -----------------
    loss0 = jax.block_until_ready(loss_roi(pred, (gt_dose, jnp.zeros_like(mask))))
    assert jnp.allclose(loss0, 0.0), loss0

    # --- non-128-aligned flat size (lane pad + always-gated single block) ----
    p2 = jax.random.normal(keys[3], (2, 3, 17, 16), dtype=jnp.float32)
    g2 = jax.random.normal(keys[4], (2, 3, 17, 16), dtype=jnp.float32)
    m2 = (jax.random.uniform(keys[5], (2, 3, 17, 16)) > 0.3).astype(jnp.float32)
    loss2 = jax.block_until_ready(loss_roi((p2,), (g2, m2)))
    ref2 = _ref_masked_mean(p2, g2, m2)
    assert jnp.allclose(loss2, ref2, rtol=1e-5, atol=1e-6), (loss2, ref2)

    # --- chunk loop + remainder chunk + 2-way half split + clamped duplicate
    #     block + partial last block (small data, forced block_rows=600) ------
    p3 = jax.random.normal(keys[6], (1, 2, 650, 128), dtype=jnp.float32)
    g3 = jax.random.normal(keys[7], (1, 2, 650, 128), dtype=jnp.float32)
    m3 = (jax.random.uniform(keys[8], (1, 2, 650, 128)) > 0.4).astype(jnp.float32)
    ref3 = _ref_masked_mean(p3, g3, m3)
    loss3 = jax.block_until_ready(loss_roi((p3,), (g3, m3), block_rows=600))
    assert jnp.allclose(loss3, ref3, rtol=1e-4, atol=1e-5), (loss3, ref3)
    loss3b = jax.block_until_ready(loss_roi((p3,), (g3, m3)))   # auto tiling
    assert jnp.allclose(loss3b, ref3, rtol=1e-4, atol=1e-5), (loss3b, ref3)

    # --- classwise (fused single pass; pooled per-class mean like PyTorch) ---
    clas = jnp.array([0, 1], dtype=jnp.int32)
    weights = [0.3, 0.7]
    loss_cw = jax.block_until_ready(loss_roi_classwise(pred, gt, clas, weights))
    ref_cw = _ref_classwise(pred_dose, gt_dose, mask, clas, weights)
    assert jnp.allclose(loss_cw, ref_cw, rtol=1e-5, atol=1e-6), (loss_cw, ref_cw)

    # empty class 0 + class 1 pooled across both batch elements
    clas_b = jnp.array([1, 1], dtype=jnp.int32)
    loss_cw2 = jax.block_until_ready(loss_roi_classwise(pred, gt, clas_b, weights))
    ref_cw2 = _ref_classwise(pred_dose, gt_dose, mask, clas_b, weights)
    assert jnp.allclose(loss_cw2, ref_cw2, rtol=1e-5, atol=1e-6), (loss_cw2, ref_cw2)

    # multi-block classwise: half split + duplicate-block gating
    p4 = jax.random.normal(keys[9], (2, 2, 80, 128), dtype=jnp.float32)
    g4 = jax.random.normal(keys[0], (2, 2, 80, 128), dtype=jnp.float32)
    m4 = (jax.random.uniform(keys[1], (2, 2, 80, 128)) > 0.5).astype(jnp.float32)
    clas_c = jnp.array([1, 0], dtype=jnp.int32)
    loss_cw3 = jax.block_until_ready(
        loss_roi_classwise((p4,), (g4, m4), clas_c, [0.25, 0.75], block_rows=64))
    ref_cw3 = _ref_classwise(p4, g4, m4, clas_c, [0.25, 0.75])
    assert jnp.allclose(loss_cw3, ref_cw3, rtol=1e-5, atol=1e-6), (loss_cw3, ref_cw3)

    print("KERNEL_OK")
</pallas_src>

<mosaic_0001>
module attributes {stable_mosaic.version = 11 : i64} {
  func.func @_roi_l1_kernel(%arg0: i32, %arg1: i32, %arg2: memref<16x128xf32, #tpu.memory_space<vmem>>, %arg3: memref<16x128xf32, #tpu.memory_space<vmem>>, %arg4: memref<16x128xf32, #tpu.memory_space<vmem>>, %arg5: memref<1x8x128xf32, #tpu.memory_space<vmem>>, %arg6: memref<1x8x128xf32, #tpu.memory_space<vmem>>, %arg7: memref<8x128xf32, #tpu.memory_space<vmem>>, %arg8: memref<8x128xf32, #tpu.memory_space<vmem>>) attributes {dimension_semantics = [#tpu.dimension_semantics<parallel>, #tpu.dimension_semantics<arbitrary>], iteration_bounds = array<i64: 1, 1>, scalar_prefetch = 0 : i64, scratch_operands = 2 : i64, tpu.core_type = #tpu.core_type<tc>, window_params = [{transform_indices = @transform_0, window_bounds = array<i64: 16, 128>}, {transform_indices = @transform_1, window_bounds = array<i64: 16, 128>}, {transform_indices = @transform_2, window_bounds = array<i64: 16, 128>}, {transform_indices = @transform_3, window_bounds = array<i64: 1, 8, 128>}, {transform_indices = @transform_4, window_bounds = array<i64: 1, 8, 128>}]} {
    %c0_i32 = arith.constant 0 : i32
    %0 = arith.cmpi eq, %arg1, %c0_i32 : i32
    %1 = arith.extui %0 : i1 to i32
    %c0_i32_0 = arith.constant 0 : i32
    %2 = arith.cmpi ne, %1, %c0_i32_0 : i32
    scf.if %2 {
      %cst_19 = arith.constant 0.000000e+00 : f32
      %27 = vector.broadcast %cst_19 : f32 to vector<8x128xf32>
      %c0_20 = arith.constant 0 : index
      %c0_21 = arith.constant 0 : index
      %28 = vector.load %arg7[%c0_20, %c0_21] : memref<8x128xf32, #tpu.memory_space<vmem>>, vector<8x128xf32>
      tpu.vector_store %arg7[%c0_20, %c0_21], %27 {strides = array<i32>} : memref<8x128xf32, #tpu.memory_space<vmem>>, vector<8x128xf32>,
      %cst_22 = arith.constant 0.000000e+00 : f32
      %29 = vector.broadcast %cst_22 : f32 to vector<8x128xf32>
      %c0_23 = arith.constant 0 : index
      %c0_24 = arith.constant 0 : index
      %30 = vector.load %arg8[%c0_23, %c0_24] : memref<8x128xf32, #tpu.memory_space<vmem>>, vector<8x128xf32>
      tpu.vector_store %arg8[%c0_23, %c0_24], %29 {strides = array<i32>} : memref<8x128xf32, #tpu.memory_space<vmem>>, vector<8x128xf32>,
    } else {
    }
    %c0 = arith.constant 0 : index
    %c0_1 = arith.constant 0 : index
    %3 = vector.load %arg2[%c0, %c0_1] : memref<16x128xf32, #tpu.memory_space<vmem>>, vector<16x128xf32>
    %c0_2 = arith.constant 0 : index
    %c0_3 = arith.constant 0 : index
    %4 = vector.load %arg3[%c0_2, %c0_3] : memref<16x128xf32, #tpu.memory_space<vmem>>, vector<16x128xf32>
    %c0_4 = arith.constant 0 : index
    %c0_5 = arith.constant 0 : index
    %5 = vector.load %arg4[%c0_4, %c0_5] : memref<16x128xf32, #tpu.memory_space<vmem>>, vector<16x128xf32>
    %cst = arith.constant 0.000000e+00 : f32
    %6 = vector.broadcast %cst : f32 to vector<16x128xf32>
    %7 = arith.cmpf ogt, %5, %6 : vector<16x128xf32>
    %8 = arith.subf %3, %4 : vector<16x128xf32>
    %9 = math.absf %8 : vector<16x128xf32>
    %cst_6 = arith.constant 0.000000e+00 : f32
    %10 = vector.broadcast %cst_6 : f32 to vector<16x128xf32>
    %11 = arith.select %7, %9, %10 : vector<16x128xi1>, vector<16x128xf32>
    %12 = vector.shape_cast %11 : vector<16x128xf32> to vector<2x8x128xf32>
    %cst_7 = arith.constant dense<0.000000e+00> : vector<8x128xf32>
    %13 = vector.multi_reduction <add>, %12, %cst_7 [0] : vector<2x8x128xf32> to vector<8x128xf32>
    %14 = arith.extui %7 : vector<16x128xi1> to vector<16x128xi32>
    %15 = arith.sitofp %14 : vector<16x128xi32> to vector<16x128xf32>
    %16 = vector.shape_cast %15 : vector<16x128xf32> to vector<2x8x128xf32>
    %cst_8 = arith.constant dense<0.000000e+00> : vector<8x128xf32>
    %17 = vector.multi_reduction <add>, %16, %cst_8 [0] : vector<2x8x128xf32> to vector<8x128xf32>
    %c0_9 = arith.constant 0 : index
    %c0_10 = arith.constant 0 : index
    %18 = vector.load %arg7[%c0_9, %c0_10] : memref<8x128xf32, #tpu.memory_space<vmem>>, vector<8x128xf32>
    %19 = arith.addf %18, %13 : vector<8x128xf32>
    %c0_11 = arith.constant 0 : index
    %c0_12 = arith.constant 0 : index
    %20 = vector.load %arg7[%c0_11, %c0_12] : memref<8x128xf32, #tpu.memory_space<vmem>>, vector<8x128xf32>
    tpu.vector_store %arg7[%c0_11, %c0_12], %19 {strides = array<i32>} : memref<8x128xf32, #tpu.memory_space<vmem>>, vector<8x128xf32>,
    %c0_13 = arith.constant 0 : index
    %c0_14 = arith.constant 0 : index
    %21 = vector.load %arg8[%c0_13, %c0_14] : memref<8x128xf32, #tpu.memory_space<vmem>>, vector<8x128xf32>
    %22 = arith.addf %21, %17 : vector<8x128xf32>
    %c0_15 = arith.constant 0 : index
    %c0_16 = arith.constant 0 : index
    %23 = vector.load %arg8[%c0_15, %c0_16] : memref<8x128xf32, #tpu.memory_space<vmem>>, vector<8x128xf32>
    tpu.vector_store %arg8[%c0_15, %c0_16], %22 {strides = array<i32>} : memref<8x128xf32, #tpu.memory_space<vmem>>, vector<8x128xf32>,
    %c0_i32_17 = arith.constant 0 : i32
    %24 = arith.cmpi eq, %arg1, %c0_i32_17 : i32
    %25 = arith.extui %24 : i1 to i32
    %c0_i32_18 = arith.constant 0 : i32
    %26 = arith.cmpi ne, %25, %c0_i32_18 : i32
    scf.if %26 {
      %c0_19 = arith.constant 0 : index
      %c0_20 = arith.constant 0 : index
      %27 = vector.load %arg7[%c0_19, %c0_20] : memref<8x128xf32, #tpu.memory_space<vmem>>, vector<8x128xf32>
      %c0_21 = arith.constant 0 : index
      %c0_22 = arith.constant 0 : index
      %c0_23 = arith.constant 0 : index
      %28 = vector.load %arg5[%c0_21, %c0_22, %c0_23] : memref<1x8x128xf32, #tpu.memory_space<vmem>>, vector<1x8x128xf32>
      %29 = vector.shape_cast %28 : vector<1x8x128xf32> to vector<8x128xf32>
      %30 = vector.shape_cast %27 : vector<8x128xf32> to vector<1x8x128xf32>
      tpu.vector_store %arg5[%c0_21, %c0_22, %c0_23], %30 {strides = array<i32>} : memref<1x8x128xf32, #tpu.memory_space<vmem>>, vector<1x8x128xf32>,
      %c0_24 = arith.constant 0 : index
      %c0_25 = arith.constant 0 : index
      %31 = vector.load %arg8[%c0_24, %c0_25] : memref<8x128xf32, #tpu.memory_space<vmem>>, vector<8x128xf32>
      %c0_26 = arith.constant 0 : index
      %c0_27 = arith.constant 0 : index
      %c0_28 = arith.constant 0 : index
      %32 = vector.load %arg6[%c0_26, %c0_27, %c0_28] : memref<1x8x128xf32, #tpu.memory_space<vmem>>, vector<1x8x128xf32>
      %33 = vector.shape_cast %32 : vector<1x8x128xf32> to vector<8x128xf32>
      %34 = vector.shape_cast %31 : vector<8x128xf32> to vector<1x8x128xf32>
      tpu.vector_store %arg6[%c0_26, %c0_27, %c0_28], %34 {strides = array<i32>} : memref<1x8x128xf32, #tpu.memory_space<vmem>>, vector<1x8x128xf32>,
    } else {
    }
    return
  }
  func.func @transform_0(%arg0: i32, %arg1: i32) -> (i32, i32) {
    %c1_i32 = arith.constant 1 : i32
    %0 = arith.muli %arg0, %c1_i32 : i32
    %1 = arith.addi %0, %arg1 : i32
    %c0_i32 = arith.constant 0 : i32
    %2 = arith.minsi %1, %c0_i32 : i32
    %c0_i32_0 = arith.constant 0 : i32
    %c0_i32_1 = arith.constant 0 : i32
    return %2, %c0_i32_0 : i32, i32
  }
  func.func @transform_1(%arg0: i32, %arg1: i32) -> (i32, i32) {
    %c1_i32 = arith.constant 1 : i32
    %0 = arith.muli %arg0, %c1_i32 : i32
    %1 = arith.addi %0, %arg1 : i32
    %c0_i32 = arith.constant 0 : i32
    %2 = arith.minsi %1, %c0_i32 : i32
    %c0_i32_0 = arith.constant 0 : i32
    %c0_i32_1 = arith.constant 0 : i32
    return %2, %c0_i32_0 : i32, i32
  }
  func.func @transform_2(%arg0: i32, %arg1: i32) -> (i32, i32) {
    %c1_i32 = arith.constant 1 : i32
    %0 = arith.muli %arg0, %c1_i32 : i32
    %1 = arith.addi %0, %arg1 : i32
    %c0_i32 = arith.constant 0 : i32
    %2 = arith.minsi %1, %c0_i32 : i32
    %c0_i32_0 = arith.constant 0 : i32
    %c0_i32_1 = arith.constant 0 : i32
    return %2, %c0_i32_0 : i32, i32
  }
  func.func @transform_3(%arg0: i32, %arg1: i32) -> (i32, i32, i32) {
    %c0_i32 = arith.constant 0 : i32
    %c0_i32_0 = arith.constant 0 : i32
    %c0_i32_1 = arith.constant 0 : i32
    return %arg0, %c0_i32, %c0_i32_0 : i32, i32, i32
  }
  func.func @transform_4(%arg0: i32, %arg1: i32) -> (i32, i32, i32) {
    %c0_i32 = arith.constant 0 : i32
    %c0_i32_0 = arith.constant 0 : i32
    %c0_i32_1 = arith.constant 0 : i32
    return %arg0, %c0_i32, %c0_i32_0 : i32, i32, i32
  }
}

</mosaic_0001>

<llo_original>
// kernel: tpu_custom_call.1
$region0: #{tpu_custom_call.1}
  #allocation0 [shape = 'u32[]', space=smem, size = 0x4, offset = 0x4, fixed_abs, tag = 'smem constant byte address 0x4 - core index']
  #allocation1 [shape = 'u32[144,128]{1,0:T(1,128)}', space=vmem, size = 0x12000, scoped, tag = 'internal scratch']
  #allocation2 [shape = 'f32[8,128]{1,0:T(8,128)}', space=vmem, size = 0x1000, scoped, tag = 'scratch operand']
  #allocation3 [shape = 'f32[8,128]{1,0:T(8,128)}', space=vmem, size = 0x1000, scoped, tag = 'scratch operand']
  %s0 = inlined_call_operand.hbm [shape: f32[16,128], index: 0, kind: input, shape index: {}]
  %s1 = inlined_call_operand.hbm [shape: f32[16,128], index: 1, kind: input, shape index: {}]
  %s2 = inlined_call_operand.hbm [shape: f32[16,128], index: 2, kind: input, shape index: {}]
  %s3 = inlined_call_operand.hbm [shape: f32[1,8,128], index: 3, kind: output, shape index: {0}]
  %s4 = inlined_call_operand.hbm [shape: f32[1,8,128], index: 4, kind: output, shape index: {1}]
  %5 = xla_tuple %s3, %s4
  %s6 = sld [smem:[#allocation0]]
  $region50: #{tpu_custom_call.1} parent=0
    _
  %s8 = ssub.s32 1, %s6
  %s9 = scalar_select 0, %s8, %s6
  $region1: #{tpu_custom_call.1} parent=0
    #allocation4 [shape = 'u8[8192]{0}', space=vmem, size = 0x2000, scoped, tag = 'input window, operand 0, single buffered']
    #allocation5 [shape = 's32[1]{0}', space=sflag, size = 0x4, scoped, tag = 'scoped memory for tpu_custom_call.1']
    #allocation6 [shape = 's32[1]{0}', space=sflag, size = 0x4, scoped, tag = 'scoped memory for tpu_custom_call.1']
    #allocation7 [shape = 'u8[8192]{0}', space=vmem, size = 0x2000, scoped, tag = 'input window, operand 1, single buffered']
    #allocation8 [shape = 's32[1]{0}', space=sflag, size = 0x4, scoped, tag = 'scoped memory for tpu_custom_call.1']
    #allocation9 [shape = 'u8[8192]{0}', space=vmem, size = 0x2000, scoped, tag = 'input window, operand 2, single buffered']
    #allocation10 [shape = 'u8[4096]{0}', space=vmem, size = 0x1000, scoped, tag = 'output window, operand 0, single buffered']
    #allocation11 [shape = 'u8[4096]{0}', space=vmem, size = 0x1000, scoped, tag = 'output window, operand 1, single buffered']
    #allocation12 [shape = 's32[1]{0}', space=sflag, size = 0x4, scoped, tag = 'scoped memory for tpu_custom_call.1']
    %10 = vsyncpa [#allocation5], 0
    %11 = vsyncpa [#allocation8], 0
    %12 = vsyncpa [#allocation6], 0
    %13 = vsyncpa [#allocation12], 0
    // Predicated region
    $region2: #{tpu_custom_call.1} parent=1 // pred_check
      _
    $region3: #{tpu_custom_call.1} parent=1 // pred_check_branch
      %15 = sbr.rel (0) target = $region5
    $region4: #{tpu_custom_call.1} parent=1 // pred_region
      %s16 = sadd.s32 0, 0
      %p17 = scmp.lt.s32.totalorder %s16, 0
      %s18 = scalar_select %p17, %s16, 0
      %s19 = smul.u32 2, %s18
      %s21 = ssub.s32 256, 256
      %22 = vsyncadd [#allocation5], %s21
      %s23 = smul.addr %s19, 128
      %s24 = scalar_lea.hbm %s0, %s23
      %s25 = sshll.u32 [#allocation4], 4
      %s26 = int_to_ptr.vmem [resolvable:$true] %s25
      %31 = dma.hbm_to_vmem [thread:$0]  %s24, 256, %s26, [#allocation5], 128, 128, 8
    $region5: #{tpu_custom_call.1} parent=1 // pred_fallthru
      _
    // Predicated region
    $region6: #{tpu_custom_call.1} parent=1 // pred_check
      _
    $region7: #{tpu_custom_call.1} parent=1 // pred_check_branch
      %33 = sbr.rel (0) target = $region9
    $region8: #{tpu_custom_call.1} parent=1 // pred_region
      %s34 = sadd.s32 0, 0
      %p35 = scmp.lt.s32.totalorder %s34, 0
      %s36 = scalar_select %p35, %s34, 0
      %s37 = smul.u32 2, %s36
      %s39 = ssub.s32 256, 256
      %40 = vsyncadd [#allocation8], %s39
      %s41 = smul.addr %s37, 128
      %s42 = scalar_lea.hbm %s1, %s41
      %s43 = sshll.u32 [#allocation7], 4
      %s44 = int_to_ptr.vmem [resolvable:$true] %s43
      %49 = dma.hbm_to_vmem [thread:$0]  %s42, 256, %s44, [#allocation8], 128, 128, 8
    $region9: #{tpu_custom_call.1} parent=1 // pred_fallthru
      _
    // Predicated region
    $region10: #{tpu_custom_call.1} parent=1 // pred_check
      _
    $region11: #{tpu_custom_call.1} parent=1 // pred_check_branch
      %51 = sbr.rel (0) target = $region13
    $region12: #{tpu_custom_call.1} parent=1 // pred_region
      %s52 = sadd.s32 0, 0
      %p53 = scmp.lt.s32.totalorder %s52, 0
      %s54 = scalar_select %p53, %s52, 0
      %s55 = smul.u32 2, %s54
      %s57 = ssub.s32 256, 256
      %58 = vsyncadd [#allocation8], %s57
      %s59 = smul.addr %s55, 128
      %s60 = scalar_lea.hbm %s2, %s59
      %s61 = sshll.u32 [#allocation9], 4
      %s62 = int_to_ptr.vmem [resolvable:$true] %s61
      %67 = dma.hbm_to_vmem [thread:$0]  %s60, 256, %s62, [#allocation8], 128, 128, 8
    $region13: #{tpu_custom_call.1} parent=1 // pred_fallthru
      _
    // Predicated region
    $region14: #{tpu_custom_call.1} parent=1 // pred_check
      _
    $region15: #{tpu_custom_call.1} parent=1 // pred_check_branch
      %69 = sbr.rel (0) target = $region17
    $region16: #{tpu_custom_call.1} parent=1 // pred_region
      %70 = dma.done [#allocation5], 256
    $region17: #{tpu_custom_call.1} parent=1 // pred_fallthru
      _
    // Predicated region
    $region18: #{tpu_custom_call.1} parent=1 // pred_check
      _
    $region19: #{tpu_custom_call.1} parent=1 // pred_check_branch
      %72 = sbr.rel (0) target = $region21
    $region20: #{tpu_custom_call.1} parent=1 // pred_region
      %73 = dma.done [#allocation8], 256
    $region21: #{tpu_custom_call.1} parent=1 // pred_fallthru
      _
    // Predicated region
    $region22: #{tpu_custom_call.1} parent=1 // pred_check
      _
    $region23: #{tpu_custom_call.1} parent=1 // pred_check_branch
      %75 = sbr.rel (0) target = $region25
    $region24: #{tpu_custom_call.1} parent=1 // pred_region
      %76 = dma.done [#allocation8], 256
    $region25: #{tpu_custom_call.1} parent=1 // pred_fallthru
      _
    %s77 = sadd.s32 0, 0
    %p78 = scmp.lt.s32.totalorder %s77, 0
    %s79 = scalar_select %p78, %s77, 0
    %s80 = smul.u32 2, %s79
    %s81 = sadd.s32 0, 0
    %p82 = scmp.lt.s32.totalorder %s81, 0
    %s83 = scalar_select %p82, %s81, 0
    %s84 = smul.u32 2, %s83
    %s85 = sadd.s32 0, 0
    %p86 = scmp.lt.s32.totalorder %s85, 0
    %s87 = scalar_select %p86, %s85, 0
    %s88 = smul.u32 2, %s87
    %p89 = scmp.eq.s32.totalorder 0, 0
    // Predicated region
    $region26: #{tpu_custom_call.1} parent=1 // pred_check
      %p90 = pneg %p89
    $region27: #{tpu_custom_call.1} parent=1 // pred_check_branch
      %92 = sbr.rel (%p90) target = $region29
    $region28: #{tpu_custom_call.1} parent=1 // pred_region
      %93 = vst [vmem:[#allocation2] sm:$0xff] 0.0
      %94 = vst [vmem:[#allocation3] sm:$0xff] 0.0
    $region29: #{tpu_custom_call.1} parent=1 // pred_fallthru
      _
    %v95 = vld [vmem:[#allocation4] sm:$0xff]
    %v96 = vld [vmem:[#allocation4 + $0x8] sm:$0xff]
    %v97 = vld [vmem:[#allocation7] sm:$0xff]
    %v98 = vld [vmem:[#allocation7 + $0x8] sm:$0xff]
    %v99 = vld [vmem:[#allocation9] sm:$0xff]
    %v100 = vld [vmem:[#allocation9 + $0x8] sm:$0xff]
    %vm101 = vcmp.gt.f32.partialorder %v99, 0.0
    %vm102 = vcmp.gt.f32.partialorder %v100, 0.0
    %v103 = vsub.f32 %v95, %v97
    %v104 = vsub.f32 %v96, %v98
    %v105 = vand.u32 2147483647, %v103
    %v106 = vand.u32 2147483647, %v104
    %v107 = vsel %vm101, %v105, 0.0
    %v108 = vsel %vm102, %v106, 0.0
    %v109 = vadd.f32 %v107, %v108
    %v110 = vsel %vm101, 1, 0
    %v111 = vsel %vm102, 1, 0
    %v112 = vcvt.s32.f32 %v110
    %v113 = vcvt.s32.f32 %v111
    %v114 = vadd.f32 %v112, %v113
    %v115 = vld [vmem:[#allocation2] sm:$0xff]
    %v116 = vadd.f32 %v115, %v109
    %117 = vst [vmem:[#allocation2] sm:$0xff] %v116
    %v118 = vld [vmem:[#allocation3] sm:$0xff]
    %v119 = vadd.f32 %v118, %v114
    %120 = vst [vmem:[#allocation3] sm:$0xff] %v119
    // Predicated region
    $region30: #{tpu_custom_call.1} parent=1 // pred_check
      %p121 = pneg %p89
    $region31: #{tpu_custom_call.1} parent=1 // pred_check_branch
      %123 = sbr.rel (%p121) target = $region33
    $region32: #{tpu_custom_call.1} parent=1 // pred_region
      %v124 = vld [vmem:[#allocation2] sm:$0xff]
      %125 = vst [vmem:[#allocation10] sm:$0xff] %v124
      %v126 = vld [vmem:[#allocation3] sm:$0xff]
      %127 = vst [vmem:[#allocation11] sm:$0xff] %v126
    $region33: #{tpu_custom_call.1} parent=1 // pred_fallthru
      _
    // Predicated region
    $region34: #{tpu_custom_call.1} parent=1 // pred_check
      _
    $region35: #{tpu_custom_call.1} parent=1 // pred_check_branch
      %129 = sbr.rel (0) target = $region37
    $region36: #{tpu_custom_call.1} parent=1 // pred_region
      %s131 = ssub.s32 128, 128
      %132 = vsyncadd [#allocation6], %s131
      %s134 = sshll.u32 [#allocation10], 4
      %s135 = int_to_ptr.vmem [resolvable:$true] %s134
      %137 = dma.vmem_to_hbm [thread:$0]  %s135, 128, %s3, [#allocation6]
    $region37: #{tpu_custom_call.1} parent=1 // pred_fallthru
      _
    // Predicated region
    $region38: #{tpu_custom_call.1} parent=1 // pred_check
      _
    $region39: #{tpu_custom_call.1} parent=1 // pred_check_branch
      %139 = sbr.rel (0) target = $region41
    $region40: #{tpu_custom_call.1} parent=1 // pred_region
      %s141 = ssub.s32 128, 128
      %142 = vsyncadd [#allocation12], %s141
      %s144 = sshll.u32 [#allocation11], 4
      %s145 = int_to_ptr.vmem [resolvable:$true] %s144
      %147 = dma.vmem_to_hbm [thread:$0]  %s145, 128, %s4, [#allocation12]
    $region41: #{tpu_custom_call.1} parent=1 // pred_fallthru
      _
    // Predicated region
    $region42: #{tpu_custom_call.1} parent=1 // pred_check
      _
    $region43: #{tpu_custom_call.1} parent=1 // pred_check_branch
      %149 = sbr.rel (0) target = $region45
    $region44: #{tpu_custom_call.1} parent=1 // pred_region
      %150 = dma.done [#allocation6], 128
    $region45: #{tpu_custom_call.1} parent=1 // pred_fallthru
      _
    // Predicated region
    $region46: #{tpu_custom_call.1} parent=1 // pred_check
      _
    $region47: #{tpu_custom_call.1} parent=1 // pred_check_branch
      %152 = sbr.rel (0) target = $region49
    $region48: #{tpu_custom_call.1} parent=1 // pred_region
      %153 = dma.done [#allocation12], 128
    $region49: #{tpu_custom_call.1} parent=1 // pred_fallthru
      _
    %154 = vsyncpa [#allocation5], 1
    %155 = vsyncpa [#allocation8], 1
    %156 = vsyncpa [#allocation6], 1
    %157 = vsyncpa [#allocation12], 1

</llo_original>
